<compile_context>
chip_gen: v7x
topology: tpu7x:2x2x1
jax: 0.10.0
libtpu: 0.0.40
codegen_flags: <defaults>
</compile_context>

<pallas_src>
import jax
import jax.numpy as jnp
from jax import lax
from jax.experimental import pallas as pl
from jax.experimental.pallas import tpu as pltpu


def gaussian_layer_kernel(x_ref, w_ref, b_ref, mu_ref, logvar_ref):
    x = x_ref[...]                      # (TB, D_in)
    w = w_ref[...]                      # (2*D_out, D_in)  -- PyTorch layout, no transpose

    # Single fused MXU pass for both heads: x @ w.T -> (TB, 2*D_out), f32 accumulate.
    slab = lax.dot_general(
        x, w,
        dimension_numbers=(((1,), (1,)), ((), ())),
        preferred_element_type=jnp.float32,
    )
    slab = slab + b_ref[...]            # f32 bias add (single fused (1, 2*D_out) bias)

    d_out = mu_ref.shape[-1]
    # mean head: plain Linear (nn_lin is None in this configuration)
    mu_ref[...] = slab[:, :d_out].astype(mu_ref.dtype)
    # variance head: Linear -> Sigmoid (kept in f32, cast at store)
    logvar_ref[...] = jax.nn.sigmoid(slab[:, d_out:]).astype(logvar_ref.dtype)


def gaussian_layer(x, w_mean, b_mean, w_var, b_var, *, tb=None):
    """x: (B, D_in); w_*: (D_out, D_in) PyTorch-style; b_*: (D_out,)."""
    B, D_in = x.shape
    D_out = w_mean.shape[0]

    # Fuse the two heads: one (2*D_out, D_in) weight (kept in PyTorch (out, in)
    # layout -- the MXU handles the transposed contraction natively) and one
    # (1, 2*D_out) bias. In a real deployment these would be stored pre-fused.
    w_cat = jnp.concatenate([jnp.asarray(w_mean), jnp.asarray(w_var)], axis=0)
    b_cat = jnp.concatenate(
        [jnp.asarray(b_mean), jnp.asarray(b_var)], axis=0
    ).reshape(1, 2 * D_out)

    # Batch tile: whole batch if small, else 256 rows (multiple of 8 sublanes).
    # v7x note: with very large D_in, re-derive against its 64 MiB VMEM
    # (2 buffers each for x / mu / logvar plus the resident fused weight).
    if tb is None:
        tb = B if B <= 256 else 256
    grid = (pl.cdiv(B, tb),)

    mu, logvar = pl.pallas_call(
        gaussian_layer_kernel,
        out_shape=(
            jax.ShapeDtypeStruct((B, D_out), x.dtype),
            jax.ShapeDtypeStruct((B, D_out), x.dtype),
        ),
        grid_spec=pltpu.PrefetchScalarGridSpec(
            num_scalar_prefetch=0,
            grid=grid,
            in_specs=[
                pl.BlockSpec((tb, D_in), lambda i: (i, 0)),            # x: tiled over B
                pl.BlockSpec((2 * D_out, D_in), lambda i: (0, 0)),     # fused weights: resident
                pl.BlockSpec((1, 2 * D_out), lambda i: (0, 0)),        # fused bias: resident
            ],
            out_specs=[
                pl.BlockSpec((tb, D_out), lambda i: (i, 0)),
                pl.BlockSpec((tb, D_out), lambda i: (i, 0)),
            ],
        ),
        compiler_params=pltpu.CompilerParams(
            dimension_semantics=("parallel",),
        ),
    )(x, w_cat, b_cat)
    return mu, logvar


def reference(x, w_mean, b_mean, w_var, b_var):
    mu = x @ w_mean.T + b_mean
    logvar = jax.nn.sigmoid(x @ w_var.T + b_var)
    return mu, logvar


if __name__ == "__main__":
    # Small shapes consistent with GaussianLayer1D: input_dim=32, output_dim=16, batch=8.
    B, D_in, D_out = 8, 32, 16
    key = jax.random.PRNGKey(0)
    kx, kwm, kbm, kwv, kbv = jax.random.split(key, 5)

    x = jax.random.normal(kx, (B, D_in), dtype=jnp.float32)
    # Deterministic synthetic parameters (PyTorch nn.Linear shapes: (out, in) and (out,)).
    # TODO(synk): init_module('Linear'/'Sigmoid') init scheme unknown; using scaled normal init.
    w_mean = jax.random.normal(kwm, (D_out, D_in), dtype=jnp.float32) * 0.1
    b_mean = jax.random.normal(kbm, (D_out,), dtype=jnp.float32) * 0.1
    w_var = jax.random.normal(kwv, (D_out, D_in), dtype=jnp.float32) * 0.1
    b_var = jax.random.normal(kbv, (D_out,), dtype=jnp.float32) * 0.1

    mu, logvar = gaussian_layer(x, w_mean, b_mean, w_var, b_var)
    jax.block_until_ready((mu, logvar))

    mu_ref, lv_ref = reference(x, w_mean, b_mean, w_var, b_var)
    assert mu.shape == (B, D_out) and logvar.shape == (B, D_out)
    assert jnp.allclose(mu, mu_ref, atol=1e-5, rtol=1e-5)
    assert jnp.allclose(logvar, lv_ref, atol=1e-5, rtol=1e-5)

    print("KERNEL_OK")
</pallas_src>

<mosaic_0001>
module attributes {stable_mosaic.version = 11 : i64} {
  func.func @gaussian_layer_kernel(%arg0: i32, %arg1: memref<8x32xf32, #tpu.memory_space<vmem>>, %arg2: memref<32x32xf32, #tpu.memory_space<vmem>>, %arg3: memref<1x32xf32, #tpu.memory_space<vmem>>, %arg4: memref<8x16xf32, #tpu.memory_space<vmem>>, %arg5: memref<8x16xf32, #tpu.memory_space<vmem>>) attributes {dimension_semantics = [#tpu.dimension_semantics<parallel>], iteration_bounds = array<i64: 1>, scalar_prefetch = 0 : i64, scratch_operands = 0 : i64, tpu.core_type = #tpu.core_type<tc>, window_params = [{transform_indices = @transform_0, window_bounds = array<i64: 8, 32>}, {pipeline_mode = #tpu.pipeline_mode<synchronous>, transform_indices = @transform_1, window_bounds = array<i64: 32, 32>}, {pipeline_mode = #tpu.pipeline_mode<synchronous>, transform_indices = @transform_2, window_bounds = array<i64: 1, 32>}, {transform_indices = @transform_3, window_bounds = array<i64: 8, 16>}, {transform_indices = @transform_4, window_bounds = array<i64: 8, 16>}]} {
    %c0 = arith.constant 0 : index
    %c0_0 = arith.constant 0 : index
    %0 = vector.load %arg1[%c0, %c0_0] : memref<8x32xf32, #tpu.memory_space<vmem>>, vector<8x32xf32>
    %c0_1 = arith.constant 0 : index
    %c0_2 = arith.constant 0 : index
    %1 = vector.load %arg2[%c0_1, %c0_2] : memref<32x32xf32, #tpu.memory_space<vmem>>, vector<32x32xf32>
    %cst = arith.constant dense<0.000000e+00> : vector<8x32xf32>
    %2 = tpu.matmul %0, %1, %cst {dimension_numbers = #tpu.dot_dimension_numbers<[1], [1], [0], [0], [0, 0, 1, 0], [], []>} : vector<8x32xf32>, vector<32x32xf32>, vector<8x32xf32> -> vector<8x32xf32>
    %c0_3 = arith.constant 0 : index
    %c0_4 = arith.constant 0 : index
    %3 = vector.load %arg3[%c0_3, %c0_4] : memref<1x32xf32, #tpu.memory_space<vmem>>, vector<1x32xf32>
    %4 = vector.broadcast %3 : vector<1x32xf32> to vector<8x32xf32>
    %5 = arith.addf %2, %4 : vector<8x32xf32>
    %6 = vector.extract_strided_slice %5 {offsets = [0, 0], sizes = [8, 16], strides = [1, 1]} : vector<8x32xf32> to vector<8x16xf32>
    %c0_5 = arith.constant 0 : index
    %c0_6 = arith.constant 0 : index
    %7 = vector.load %arg4[%c0_5, %c0_6] : memref<8x16xf32, #tpu.memory_space<vmem>>, vector<8x16xf32>
    tpu.vector_store %arg4[%c0_5, %c0_6], %6 {strides = array<i32>} : memref<8x16xf32, #tpu.memory_space<vmem>>, vector<8x16xf32>,
    %8 = vector.extract_strided_slice %5 {offsets = [0, 16], sizes = [8, 16], strides = [1, 1]} : vector<8x32xf32> to vector<8x16xf32>
    %9 = arith.negf %8 : vector<8x16xf32>
    %10 = math.exp %9 : vector<8x16xf32>
    %cst_7 = arith.constant 1.000000e+00 : f32
    %11 = vector.broadcast %cst_7 : f32 to vector<8x16xf32>
    %12 = arith.addf %11, %10 : vector<8x16xf32>
    %13 = arith.divf %11, %12 : vector<8x16xf32>
    %c0_8 = arith.constant 0 : index
    %c0_9 = arith.constant 0 : index
    %14 = vector.load %arg5[%c0_8, %c0_9] : memref<8x16xf32, #tpu.memory_space<vmem>>, vector<8x16xf32>
    tpu.vector_store %arg5[%c0_8, %c0_9], %13 {strides = array<i32>} : memref<8x16xf32, #tpu.memory_space<vmem>>, vector<8x16xf32>,
    return
  }
  func.func @transform_0(%arg0: i32) -> (i32, i32) {
    %c0_i32 = arith.constant 0 : i32
    %c0_i32_0 = arith.constant 0 : i32
    return %arg0, %c0_i32 : i32, i32
  }
  func.func @transform_1(%arg0: i32) -> (i32, i32) {
    %c0_i32 = arith.constant 0 : i32
    %c0_i32_0 = arith.constant 0 : i32
    %c0_i32_1 = arith.constant 0 : i32
    return %c0_i32, %c0_i32_0 : i32, i32
  }
  func.func @transform_2(%arg0: i32) -> (i32, i32) {
    %c0_i32 = arith.constant 0 : i32
    %c0_i32_0 = arith.constant 0 : i32
    %c0_i32_1 = arith.constant 0 : i32
    return %c0_i32, %c0_i32_0 : i32, i32
  }
  func.func @transform_3(%arg0: i32) -> (i32, i32) {
    %c0_i32 = arith.constant 0 : i32
    %c0_i32_0 = arith.constant 0 : i32
    return %arg0, %c0_i32 : i32, i32
  }
  func.func @transform_4(%arg0: i32) -> (i32, i32) {
    %c0_i32 = arith.constant 0 : i32
    %c0_i32_0 = arith.constant 0 : i32
    return %arg0, %c0_i32 : i32, i32
  }
}

</mosaic_0001>

<llo_original>
// kernel: tpu_custom_call.1
$region0: #{tpu_custom_call.1}
  #allocation0 [shape = 'u32[]', space=smem, size = 0x4, offset = 0x4, fixed_abs, tag = 'smem constant byte address 0x4 - core index']
  #allocation1 [shape = 'u32[144,128]{1,0:T(1,128)}', space=vmem, size = 0x12000, scoped, tag = 'internal scratch']
  %s0 = inlined_call_operand.hbm [shape: f32[8,32], index: 0, kind: input, shape index: {}]
  %s1 = inlined_call_operand.hbm [shape: f32[32,32], index: 1, kind: input, shape index: {}]
  %s2 = inlined_call_operand.vmem [shape: f32[1,32], index: 2, kind: input, shape index: {}]
  %s3 = inlined_call_operand.hbm [shape: f32[8,16], index: 3, kind: output, shape index: {0}]
  %s4 = inlined_call_operand.hbm [shape: f32[8,16], index: 4, kind: output, shape index: {1}]
  %5 = xla_tuple %s3, %s4
  %s6 = sld [smem:[#allocation0]]
  $region38: #{tpu_custom_call.1} parent=0
    _
  %s8 = ssub.s32 1, %s6
  %s9 = scalar_select 0, %s8, %s6
  $region1: #{tpu_custom_call.1} parent=0
    #allocation2 [shape = 'u8[4096]{0}', space=vmem, size = 0x1000, scoped, tag = 'input window, operand 0, single buffered']
    #allocation3 [shape = 's32[1]{0}', space=sflag, size = 0x4, scoped, tag = 'scoped memory for tpu_custom_call.1']
    #allocation4 [shape = 's32[1]{0}', space=sflag, size = 0x4, scoped, tag = 'scoped memory for tpu_custom_call.1']
    #allocation5 [shape = 'u8[16384]{0}', space=vmem, size = 0x4000, scoped, tag = 'input window, operand 1, single buffered']
    #allocation6 [shape = 's32[1]{0}', space=sflag, size = 0x4, scoped, tag = 'scoped memory for tpu_custom_call.1']
    #allocation7 [shape = 'u8[4096]{0}', space=vmem, size = 0x1000, scoped, tag = 'output window, operand 0, single buffered']
    #allocation8 [shape = 'u8[4096]{0}', space=vmem, size = 0x1000, scoped, tag = 'output window, operand 1, single buffered']
    #allocation9 [shape = 's32[1]{0}', space=sflag, size = 0x4, scoped, tag = 'scoped memory for tpu_custom_call.1']
    %10 = vsyncpa [#allocation3], 0
    %11 = vsyncpa [#allocation6], 0
    %12 = vsyncpa [#allocation4], 0
    %13 = vsyncpa [#allocation9], 0
    // Predicated region
    $region2: #{tpu_custom_call.1} parent=1 // pred_check
      _
    $region3: #{tpu_custom_call.1} parent=1 // pred_check_branch
      %15 = sbr.rel (0) target = $region5
    $region4: #{tpu_custom_call.1} parent=1 // pred_region
      %s17 = ssub.s32 128, 128
      %18 = vsyncadd [#allocation3], %s17
      %s20 = sshll.u32 [#allocation2], 4
      %s21 = int_to_ptr.vmem [resolvable:$true] %s20
      %23 = dma.hbm_to_vmem [thread:$0]  %s0, 128, %s21, [#allocation3]
    $region5: #{tpu_custom_call.1} parent=1 // pred_fallthru
      _
    // Predicated region
    $region6: #{tpu_custom_call.1} parent=1 // pred_check
      _
    $region7: #{tpu_custom_call.1} parent=1 // pred_check_branch
      %25 = sbr.rel (0) target = $region9
    $region8: #{tpu_custom_call.1} parent=1 // pred_region
      %s27 = ssub.s32 512, 512
      %28 = vsyncadd [#allocation6], %s27
      %s29 = sshll.u32 [#allocation5], 4
      %s30 = int_to_ptr.vmem [resolvable:$true] %s29
      %35 = dma.hbm_to_vmem [thread:$0]  %s1, 512, %s30, [#allocation6], 128, 128, 8
    $region9: #{tpu_custom_call.1} parent=1 // pred_fallthru
      _
    // Predicated region
    $region10: #{tpu_custom_call.1} parent=1 // pred_check
      _
    $region11: #{tpu_custom_call.1} parent=1 // pred_check_branch
      %37 = sbr.rel (0) target = $region13
    $region12: #{tpu_custom_call.1} parent=1 // pred_region
      _
    $region13: #{tpu_custom_call.1} parent=1 // pred_fallthru
      _
    // Predicated region
    $region14: #{tpu_custom_call.1} parent=1 // pred_check
      _
    $region15: #{tpu_custom_call.1} parent=1 // pred_check_branch
      %39 = sbr.rel (0) target = $region17
    $region16: #{tpu_custom_call.1} parent=1 // pred_region
      %40 = dma.done [#allocation3], 128
    $region17: #{tpu_custom_call.1} parent=1 // pred_fallthru
      _
    // Predicated region
    $region18: #{tpu_custom_call.1} parent=1 // pred_check
      _
    $region19: #{tpu_custom_call.1} parent=1 // pred_check_branch
      %42 = sbr.rel (0) target = $region21
    $region20: #{tpu_custom_call.1} parent=1 // pred_region
      %43 = dma.done [#allocation6], 512
    $region21: #{tpu_custom_call.1} parent=1 // pred_fallthru
      _
    %v44 = vld [vmem:[#allocation2] sm:$0xff]
    %v45 = vld [vmem:[#allocation5] sm:$0xff]
    %v46 = vld [vmem:[#allocation5 + $0x8] sm:$0xff]
    %v47 = vld [vmem:[#allocation5 + $0x10] sm:$0xff]
    %v48 = vld [vmem:[#allocation5 + $0x18] sm:$0xff]
    %v49 = vld [vmem:[%s2] sm:$0x1]
    %v51 = vlaneseq
    %v52 = vshrl.u32 %v51, 7
    %v53 = vsub.s32 0, %v52
    %v54 = vrot.slane %v49, %v53
    %vm56 = vcmask 261120
    %v58 = vsel %vm56, %v44, 0
    %v61 = vsel %vm56, %v45, 0
    %v64 = vsel %vm56, %v46, 0
    %v67 = vsel %vm56, %v47, 0
    %v70 = vsel %vm56, %v48, 0
    %72 = vmatprep.subr.mxu0 0.0
    %73 = vmatpush1.xpose.msra.mxu0 %v61
    %74 = vmatprep.subr.mxu0 0.0
    %75 = vmatpush1.xpose.msra.mxu0 %v64
    %76 = vmatprep.subr.mxu0 0.0
    %77 = vmatpush1.xpose.msra.mxu0 %v67
    %78 = vmatprep.subr.mxu0 0.0
    %79 = vmatpush1.xpose.msra.mxu0 %v70
    %80 = vmatprep.subr.mxu0 0.0
    %81 = vmatpush1.xpose.msra.mxu0 0.0
    %82 = vmatprep.subr.mxu0 0.0
    %83 = vmatpush1.xpose.msra.mxu0 0.0
    %84 = vmatprep.subr.mxu0 0.0
    %85 = vmatpush1.xpose.msra.mxu0 0.0
    %86 = vmatprep.subr.mxu0 0.0
    %87 = vmatpush1.xpose.msra.mxu0 0.0
    %88 = vmatprep.subr.mxu0 0.0
    %89 = vmatpush1.xpose.msra.mxu0 0.0
    %90 = vmatprep.subr.mxu0 0.0
    %91 = vmatpush1.xpose.msra.mxu0 0.0
    %92 = vmatprep.subr.mxu0 0.0
    %93 = vmatpush1.xpose.msra.mxu0 0.0
    %94 = vmatprep.subr.mxu0 0.0
    %95 = vmatpush1.xpose.msra.mxu0 0.0
    %96 = vmatprep.subr.mxu0 0.0
    %97 = vmatpush1.xpose.msra.mxu0 0.0
    %98 = vmatprep.subr.mxu0 0.0
    %99 = vmatpush1.xpose.msra.mxu0 0.0
    %100 = vmatprep.subr.mxu0 0.0
    %101 = vmatpush1.xpose.msra.mxu0 0.0
    %102 = vmatprep.subr.mxu0 0.0
    %103 = vmatpush1.xpose.msra.mxu0 0.0
    %104 = vmatprep.subr.mxu0 0.0
    %105 = vmatpush1.xpose.msra.mxu0 0.0
    %106 = vmatprep.subr.mxu0 0.0
    %107 = vmatpush1.xpose.msra.mxu0 0.0
    %108 = vmatprep.subr.mxu0 0.0
    %109 = vmatpush1.xpose.msra.mxu0 0.0
    %110 = vmatprep.subr.mxu0 0.0
    %111 = vmatpush1.xpose.msra.mxu0 0.0
    %112 = vmatprep.subr.mxu0 0.0
    %113 = vmatpush1.xpose.msra.mxu0 0.0
    %114 = vmatprep.subr.mxu0 0.0
    %115 = vmatpush1.xpose.msra.mxu0 0.0
    %116 = vmatprep.subr.mxu0 0.0
    %117 = vmatpush1.xpose.msra.mxu0 0.0
    %118 = vmatprep.subr.mxu0 0.0
    %119 = vmatpush1.xpose.msra.mxu0 0.0
    %120 = vmatprep.subr.mxu0 0.0
    %121 = vmatpush1.xpose.msra.mxu0 0.0
    %122 = vmatprep.subr.mxu0 0.0
    %123 = vmatpush1.xpose.msra.mxu0 0.0
    %124 = vmatprep.subr.mxu0 0.0
    %125 = vmatpush1.xpose.msra.mxu0 0.0
    %126 = vmatprep.subr.mxu0 0.0
    %127 = vmatpush1.xpose.msra.mxu0 0.0
    %128 = vmatprep.subr.mxu0 0.0
    %129 = vmatpush1.xpose.msra.mxu0 0.0
    %130 = vmatprep.subr.mxu0 0.0
    %131 = vmatpush1.xpose.msra.mxu0 0.0
    %132 = vmatprep.subr.mxu0 0.0
    %133 = vmatpush1.xpose.msra.mxu0 0.0
    %134 = vmatprep.subr.mxu0 0.0
    %135 = vmatpush1.xpose.msra.mxu0 0.0
    %136 = vmatprep.mubr.f32.mxu0 0.0
    %137 = vmatmul.mubr.f32.gmra.mrb[0].mxu0 %v58
    %v138 = vpop.f32.mrb[0].mxu0
    %v139 = vadd.f32 %v54, %v138
    %v140 = vpop.f32.mrb[0].mxu0
    %141 = vdwg.mxu0
    %vm142 = vcmask 130048
    %143 = vst.msk [vmem:[#allocation7] sm:$0xff] %vm142, %v139
    %v144 = vxor.u32 %v139, 2147483648
    %v145 = vmul.f32 %v144, 1.442695
    %v146 = vpow.pop %v145
    %v147 = vadd.f32 %v146, 1.0
    %v148 = vrcp.pop %v147
    %v149 = vmul.f32 1.0, %v148
    %151 = vrot.lane.b32.xlu0 %v149, 112
    %v152 = vpop.permute.xlu0 %151
    %154 = vst.msk [vmem:[#allocation8] sm:$0xff] %vm142, %v152
    // Predicated region
    $region22: #{tpu_custom_call.1} parent=1 // pred_check
      _
    $region23: #{tpu_custom_call.1} parent=1 // pred_check_branch
      %156 = sbr.rel (0) target = $region25
    $region24: #{tpu_custom_call.1} parent=1 // pred_region
      %s158 = ssub.s32 128, 128
      %159 = vsyncadd [#allocation4], %s158
      %s161 = sshll.u32 [#allocation7], 4
      %s162 = int_to_ptr.vmem [resolvable:$true] %s161
      %164 = dma.vmem_to_hbm [thread:$0]  %s162, 128, %s3, [#allocation4]
    $region25: #{tpu_custom_call.1} parent=1 // pred_fallthru
      _
    // Predicated region
    $region26: #{tpu_custom_call.1} parent=1 // pred_check
      _
    $region27: #{tpu_custom_call.1} parent=1 // pred_check_branch
      %166 = sbr.rel (0) target = $region29
    $region28: #{tpu_custom_call.1} parent=1 // pred_region
      %s168 = ssub.s32 128, 128
      %169 = vsyncadd [#allocation9], %s168
      %s171 = sshll.u32 [#allocation8], 4
      %s172 = int_to_ptr.vmem [resolvable:$true] %s171
      %174 = dma.vmem_to_hbm [thread:$0]  %s172, 128, %s4, [#allocation9]
    $region29: #{tpu_custom_call.1} parent=1 // pred_fallthru
      _
    // Predicated region
    $region30: #{tpu_custom_call.1} parent=1 // pred_check
      _
    $region31: #{tpu_custom_call.1} parent=1 // pred_check_branch
      %176 = sbr.rel (0) target = $region33
    $region32: #{tpu_custom_call.1} parent=1 // pred_region
      %177 = dma.done [#allocation4], 128
    $region33: #{tpu_custom_call.1} parent=1 // pred_fallthru
      _
    // Predicated region
    $region34: #{tpu_custom_call.1} parent=1 // pred_check
      _
    $region35: #{tpu_custom_call.1} parent=1 // pred_check_branch
      %179 = sbr.rel (0) target = $region37
    $region36: #{tpu_custom_call.1} parent=1 // pred_region
      %180 = dma.done [#allocation9], 128
    $region37: #{tpu_custom_call.1} parent=1 // pred_fallthru
      _
    %181 = vsyncpa [#allocation3], 1
    %182 = vsyncpa [#allocation6], 1
    %183 = vsyncpa [#allocation4], 1
    %184 = vsyncpa [#allocation9], 1

</llo_original>
